<compile_context>
chip_gen: v5e
topology: v5e:2x2
jax: 0.10.0
libtpu: 0.0.40
codegen_flags: <defaults>
</compile_context>

<pallas_src>
from functools import partial

import jax
import jax.numpy as jnp
from jax.experimental import pallas as pl
from jax.experimental.pallas import tpu as pltpu


def _round_up(x, m):
    return (x + m - 1) // m * m


def _make_rhs_kernel(order, has_zc, d_sv):
    """Build the fused ODE-RHS kernel.

    Computes in one pass (everything VMEM resident, no per-eval HBM copies):
        h   = tanh(sv @ W1[:d_sv] + zc @ W1[d_sv:] + b1)     # fused concat_zc
        out = h @ W2p + b2p (+ sv @ P   when order == 2)     # fused [ds | dv]
    W2p / b2p were column-padded at init so dv already lands in lanes [q:D);
    P is the exact 0/1 selector that routes sv[:, q:] into lanes [0:q).
    """

    def kernel(*refs):
        it = iter(refs)
        sv_ref = next(it)
        zc_ref = next(it) if has_zc else None
        w1_ref = next(it)
        b1_ref = next(it)
        w2_ref = next(it)
        b2_ref = next(it)
        p_ref = next(it) if order == 2 else None
        o_ref = next(it)

        sv = sv_ref[...]
        # fused concat_zc: split-W1 matmul instead of materializing [sv | zc]
        if has_zc:
            h = jnp.dot(sv, w1_ref[:d_sv, :], preferred_element_type=jnp.float32)
            h = h + jnp.dot(zc_ref[...], w1_ref[d_sv:, :],
                            preferred_element_type=jnp.float32)
        else:
            h = jnp.dot(sv, w1_ref[...], preferred_element_type=jnp.float32)
        h = jnp.tanh(h + b1_ref[...])
        out = jnp.dot(h, w2_ref[...], preferred_element_type=jnp.float32) + b2_ref[...]
        if order == 2:
            # fused second-order concat([ds, dv], -1): ds passthrough as an
            # exact 0/1 selector matmul -> single lane-dense output store.
            out = out + jnp.dot(sv, p_ref[...], preferred_element_type=jnp.float32)
        o_ref[...] = out.astype(o_ref.dtype)

    return kernel


@partial(jax.jit, static_argnames=("order",))
def _ode_rhs(sv, zc, params, *, order):
    """One RHS evaluation, fully fused into a single no-grid pallas_call."""
    S, B, d_sv = sv.shape
    R = S * B
    operands = [sv.reshape(R, d_sv)]
    if zc is not None:
        operands.append(zc.reshape(R, zc.shape[-1]))
    operands.extend(params)
    d_out = params[3].shape[-1]            # (padded) b2 gives output lane width

    kernel = _make_rhs_kernel(order, zc is not None, d_sv)
    vmem = pl.BlockSpec(memory_space=pltpu.MemorySpace.VMEM)
    out = pl.pallas_call(
        kernel,
        out_shape=jax.ShapeDtypeStruct((R, d_out), sv.dtype),
        in_specs=[vmem] * len(operands),
        out_specs=vmem,
    )(*operands)
    return out.reshape(S, B, d_out)


class ODEfunc:
    """JAX port of model/core/flow.py::ODEfunc with a 2-layer MLP diffeq."""

    def __init__(self, params, order):
        if order not in (1, 2):
            raise ValueError("order must be 1 or 2")
        w1, b1, w2, b2 = params
        H = w1.shape[1]
        Hp = _round_up(H, 128)                       # lane-dense hidden dim
        w1p = jnp.pad(w1, ((0, 0), (0, Hp - H)))
        b1p = jnp.pad(jnp.reshape(b1, (1, -1)), ((0, 0), (0, Hp - H)))
        w2p = jnp.pad(w2, ((0, Hp - H), (0, 0)))     # tanh(0)=0 rows -> exact 0
        b2p = jnp.reshape(b2, (1, -1))
        if order == 2:
            q = w2.shape[1]                          # dv dim == D // 2
            d = 2 * q
            # shift dv into output lanes [q:d); ds is routed by selector `sel`
            w2p = jnp.pad(w2p, ((0, 0), (q, 0)))
            b2p = jnp.pad(b2p, ((0, 0), (q, 0)))
            sel = jnp.zeros((d, d), w1.dtype).at[q:, :q].set(
                jnp.eye(q, dtype=w1.dtype))
            self.params = (w1p, b1p, w2p, b2p, sel)
        else:
            self.params = (w1p, b1p, w2p, b2p)
        self.order = order
        # TODO(synk): host-side counter undercounts under jax.jit / scan-based
        # integrators (same caveat as the PyTorch buffer semantics under trace).
        self._num_evals = 0.0
        self.zc = None

    def augment(self, zc=None):
        self.zc = zc

    def before_odeint(self, rebuild_cache, zc=None):
        self._num_evals = 0.0
        # TODO(synk): diffeq.build_cache() (fixing random-variable draws for
        # GP/np diffeqs) has no equivalent for this deterministic MLP diffeq.

    def num_evals(self):
        return self._num_evals

    def concat_zc(self, sv):
        # Kept for API parity with the PyTorch module; the fused kernel does
        # this concat implicitly via the split-W1 matmul (never materialized).
        if self.zc is not None:
            return jnp.concatenate([sv, self.zc], -1)
        return sv

    def first_order(self, sv):
        return _ode_rhs(sv, self.zc, self.params, order=1)

    def second_order(self, sv):
        return _ode_rhs(sv, self.zc, self.params, order=2)

    def __call__(self, t, sv):
        self._num_evals += 1
        if self.order == 1:
            return self.first_order(sv)
        elif self.order == 2:
            return self.second_order(sv)
        raise ValueError("order must be 1 or 2")

    # TODO(synk): a fixed-step ODE integrator should amortize pallas_call
    # overhead by looping RK stages/steps inside one kernel with the weights
    # VMEM-resident; the solver itself is outside this module's spec.


if __name__ == "__main__":
    key = jax.random.PRNGKey(0)
    kx, kz, k1, k2, k3, k4 = jax.random.split(key, 6)

    # shapes: mc-samples S=2, batch B=8, state dim D=32 (order-2 => q=16),
    # augmented context zc dim C=8, hidden H=64 (padded to 128 inside ODEfunc).
    S, B, D, C, H = 2, 8, 32, 8, 64
    q = D // 2
    D_in = D + C
    D_out = q

    sv = jax.random.normal(kx, (S, B, D), dtype=jnp.float32)
    zc = jax.random.normal(kz, (S, B, C), dtype=jnp.float32)
    t = jnp.float32(0.0)

    w1 = jax.random.normal(k1, (D_in, H), dtype=jnp.float32) * 0.1
    b1 = jax.random.normal(k2, (1, H), dtype=jnp.float32) * 0.01
    w2 = jax.random.normal(k3, (H, D_out), dtype=jnp.float32) * 0.1
    b2 = jax.random.normal(k4, (1, D_out), dtype=jnp.float32) * 0.01

    # ---- order-2 path (main) ----
    ode2 = ODEfunc(params=(w1, b1, w2, b2), order=2)
    ode2.before_odeint(rebuild_cache=True)
    ode2.augment(zc)
    out2 = jax.block_until_ready(ode2(t, sv))
    assert out2.shape == (S, B, D), out2.shape
    assert ode2.num_evals() == 1.0

    x_ref = jnp.concatenate([sv, zc], -1).reshape(S * B, D_in)
    dv_ref = (jnp.tanh(x_ref @ w1 + b1) @ w2 + b2).reshape(S, B, D_out)
    ref2 = jnp.concatenate([sv[:, :, q:], dv_ref], 2)
    assert jnp.allclose(out2, ref2, atol=1e-4, rtol=1e-4)

    # ---- order-1 path (diffeq output matches the full state dim) ----
    w2o = jax.random.normal(k3, (H, D), dtype=jnp.float32) * 0.1
    b2o = jax.random.normal(k4, (1, D), dtype=jnp.float32) * 0.01
    ode1 = ODEfunc(params=(w1, b1, w2o, b2o), order=1)
    ode1.before_odeint(rebuild_cache=True)
    ode1.augment(zc)
    out1 = jax.block_until_ready(ode1(t, sv))
    ref1 = (jnp.tanh(x_ref @ w1 + b1) @ w2o + b2o).reshape(S, B, D)
    assert out1.shape == (S, B, D), out1.shape
    assert jnp.allclose(out1, ref1, atol=1e-4, rtol=1e-4)

    print("KERNEL_OK")
</pallas_src>

<mosaic_0001>
module attributes {stable_mosaic.version = 11 : i64} {
  func.func @kernel(%arg0: memref<16x32xf32, #tpu.memory_space<vmem>>, %arg1: memref<16x8xf32, #tpu.memory_space<vmem>>, %arg2: memref<40x128xf32, #tpu.memory_space<vmem>>, %arg3: memref<1x128xf32, #tpu.memory_space<vmem>>, %arg4: memref<128x32xf32, #tpu.memory_space<vmem>>, %arg5: memref<1x32xf32, #tpu.memory_space<vmem>>, %arg6: memref<32x32xf32, #tpu.memory_space<vmem>>, %arg7: memref<16x32xf32, #tpu.memory_space<vmem>>) attributes {dimension_semantics = [], scalar_prefetch = 0 : i64, scratch_operands = 0 : i64, tpu.core_type = #tpu.core_type<tc>} {
    %c0 = arith.constant 0 : index
    %c0_0 = arith.constant 0 : index
    %0 = vector.load %arg0[%c0, %c0_0] : memref<16x32xf32, #tpu.memory_space<vmem>>, vector<16x32xf32>
    %c0_1 = arith.constant 0 : index
    %c0_2 = arith.constant 0 : index
    %1 = vector.load %arg2[%c0_1, %c0_2] : memref<40x128xf32, #tpu.memory_space<vmem>>, vector<32x128xf32>
    %cst = arith.constant dense<0.000000e+00> : vector<16x128xf32>
    %2 = tpu.matmul %0, %1, %cst {dimension_numbers = #tpu.dot_dimension_numbers<[1], [0], [0], [1], [0, 0, 1, 1], [], []>} : vector<16x32xf32>, vector<32x128xf32>, vector<16x128xf32> -> vector<16x128xf32>
    %c0_3 = arith.constant 0 : index
    %c0_4 = arith.constant 0 : index
    %3 = vector.load %arg1[%c0_3, %c0_4] : memref<16x8xf32, #tpu.memory_space<vmem>>, vector<16x8xf32>
    %c32 = arith.constant 32 : index
    %c0_5 = arith.constant 0 : index
    %4 = vector.load %arg2[%c32, %c0_5] : memref<40x128xf32, #tpu.memory_space<vmem>>, vector<8x128xf32>
    %cst_6 = arith.constant dense<0.000000e+00> : vector<16x128xf32>
    %5 = tpu.matmul %3, %4, %cst_6 {dimension_numbers = #tpu.dot_dimension_numbers<[1], [0], [0], [1], [0, 0, 1, 1], [], []>} : vector<16x8xf32>, vector<8x128xf32>, vector<16x128xf32> -> vector<16x128xf32>
    %6 = arith.addf %2, %5 : vector<16x128xf32>
    %c0_7 = arith.constant 0 : index
    %c0_8 = arith.constant 0 : index
    %7 = vector.load %arg3[%c0_7, %c0_8] : memref<1x128xf32, #tpu.memory_space<vmem>>, vector<1x128xf32>
    %8 = vector.broadcast %7 : vector<1x128xf32> to vector<16x128xf32>
    %9 = arith.addf %6, %8 : vector<16x128xf32>
    %10 = math.tanh %9 : vector<16x128xf32>
    %c0_9 = arith.constant 0 : index
    %c0_10 = arith.constant 0 : index
    %11 = vector.load %arg4[%c0_9, %c0_10] : memref<128x32xf32, #tpu.memory_space<vmem>>, vector<128x32xf32>
    %cst_11 = arith.constant dense<0.000000e+00> : vector<16x32xf32>
    %12 = tpu.matmul %10, %11, %cst_11 {dimension_numbers = #tpu.dot_dimension_numbers<[1], [0], [0], [1], [0, 0, 1, 1], [], []>} : vector<16x128xf32>, vector<128x32xf32>, vector<16x32xf32> -> vector<16x32xf32>
    %c0_12 = arith.constant 0 : index
    %c0_13 = arith.constant 0 : index
    %13 = vector.load %arg5[%c0_12, %c0_13] : memref<1x32xf32, #tpu.memory_space<vmem>>, vector<1x32xf32>
    %14 = vector.broadcast %13 : vector<1x32xf32> to vector<16x32xf32>
    %15 = arith.addf %12, %14 : vector<16x32xf32>
    %c0_14 = arith.constant 0 : index
    %c0_15 = arith.constant 0 : index
    %16 = vector.load %arg6[%c0_14, %c0_15] : memref<32x32xf32, #tpu.memory_space<vmem>>, vector<32x32xf32>
    %cst_16 = arith.constant dense<0.000000e+00> : vector<16x32xf32>
    %17 = tpu.matmul %0, %16, %cst_16 {dimension_numbers = #tpu.dot_dimension_numbers<[1], [0], [0], [1], [0, 0, 1, 1], [], []>} : vector<16x32xf32>, vector<32x32xf32>, vector<16x32xf32> -> vector<16x32xf32>
    %18 = arith.addf %15, %17 : vector<16x32xf32>
    %c0_17 = arith.constant 0 : index
    %c0_18 = arith.constant 0 : index
    %19 = vector.load %arg7[%c0_17, %c0_18] : memref<16x32xf32, #tpu.memory_space<vmem>>, vector<16x32xf32>
    tpu.vector_store %arg7[%c0_17, %c0_18], %18 {strides = array<i32>} : memref<16x32xf32, #tpu.memory_space<vmem>>, vector<16x32xf32>,
    return
  }
}

</mosaic_0001>

<llo_original>
// kernel: _ode_rhs.1
$region0: #{_ode_rhs.1}
  #allocation0 [shape = 'u32[]', space=smem, size = 0x4, offset = 0x4, fixed_abs, tag = 'smem constant byte address 0x4 - core index']
  #allocation1 [shape = 'u32[72,128]{1,0:T(1,128)}', space=vmem, size = 0x9000, scoped, tag = 'internal scratch']
  %s0 = inlined_call_operand.vmem [shape: f32[16,32], index: 0, kind: input, shape index: {}]
  %s1 = inlined_call_operand.vmem [shape: f32[16,8], index: 1, kind: input, shape index: {}]
  %s2 = inlined_call_operand.vmem [shape: f32[40,128], index: 2, kind: input, shape index: {}]
  %s3 = inlined_call_operand.vmem [shape: f32[1,128], index: 3, kind: input, shape index: {}]
  %s4 = inlined_call_operand.vmem [shape: f32[128,32], index: 4, kind: input, shape index: {}]
  %s5 = inlined_call_operand.vmem [shape: f32[1,32], index: 5, kind: input, shape index: {}]
  %s6 = inlined_call_operand.vmem [shape: f32[32,32], index: 6, kind: input, shape index: {}]
  %s7 = inlined_call_operand.hbm [shape: f32[16,32], index: 7, kind: output, shape index: {}]
  %s8 = sld [smem:[#allocation0]]
  $region38: #{_ode_rhs.1} parent=0
    _
  %s10 = ssub.s32 1, %s8
  %s11 = scalar_select 0, %s10, %s8
  $region1: #{_ode_rhs.1} parent=0
    #allocation2 [shape = 'u8[8192]{0}', space=vmem, size = 0x2000, scoped, tag = 'output window, operand 0, single buffered']
    #allocation3 [shape = 's32[1]{0}', space=sflag, size = 0x4, scoped, tag = 'scoped memory for _ode_rhs.1']
    %12 = vsyncpa [#allocation3], 0
    // Predicated region
    $region2: #{_ode_rhs.1} parent=1 // pred_check
      _
    $region3: #{_ode_rhs.1} parent=1 // pred_check_branch
      %14 = sbr.rel (0) target = $region5
    $region4: #{_ode_rhs.1} parent=1 // pred_region
      _
    $region5: #{_ode_rhs.1} parent=1 // pred_fallthru
      _
    // Predicated region
    $region6: #{_ode_rhs.1} parent=1 // pred_check
      _
    $region7: #{_ode_rhs.1} parent=1 // pred_check_branch
      %16 = sbr.rel (0) target = $region9
    $region8: #{_ode_rhs.1} parent=1 // pred_region
      _
    $region9: #{_ode_rhs.1} parent=1 // pred_fallthru
      _
    // Predicated region
    $region10: #{_ode_rhs.1} parent=1 // pred_check
      _
    $region11: #{_ode_rhs.1} parent=1 // pred_check_branch
      %18 = sbr.rel (0) target = $region13
    $region12: #{_ode_rhs.1} parent=1 // pred_region
      _
    $region13: #{_ode_rhs.1} parent=1 // pred_fallthru
      _
    // Predicated region
    $region14: #{_ode_rhs.1} parent=1 // pred_check
      _
    $region15: #{_ode_rhs.1} parent=1 // pred_check_branch
      %20 = sbr.rel (0) target = $region17
    $region16: #{_ode_rhs.1} parent=1 // pred_region
      _
    $region17: #{_ode_rhs.1} parent=1 // pred_fallthru
      _
    // Predicated region
    $region18: #{_ode_rhs.1} parent=1 // pred_check
      _
    $region19: #{_ode_rhs.1} parent=1 // pred_check_branch
      %22 = sbr.rel (0) target = $region21
    $region20: #{_ode_rhs.1} parent=1 // pred_region
      _
    $region21: #{_ode_rhs.1} parent=1 // pred_fallthru
      _
    // Predicated region
    $region22: #{_ode_rhs.1} parent=1 // pred_check
      _
    $region23: #{_ode_rhs.1} parent=1 // pred_check_branch
      %24 = sbr.rel (0) target = $region25
    $region24: #{_ode_rhs.1} parent=1 // pred_region
      _
    $region25: #{_ode_rhs.1} parent=1 // pred_fallthru
      _
    // Predicated region
    $region26: #{_ode_rhs.1} parent=1 // pred_check
      _
    $region27: #{_ode_rhs.1} parent=1 // pred_check_branch
      %26 = sbr.rel (0) target = $region29
    $region28: #{_ode_rhs.1} parent=1 // pred_region
      _
    $region29: #{_ode_rhs.1} parent=1 // pred_fallthru
      _
    %v27 = vld [vmem:[%s0] sm:$0xff]
    %v28 = vld [vmem:[%s0 + $0x8] sm:$0xff]
    %v29 = vld [vmem:[%s2] sm:$0xff]
    %v30 = vld [vmem:[%s2 + $0x8] sm:$0xff]
    %v31 = vld [vmem:[%s2 + $0x10] sm:$0xff]
    %v32 = vld [vmem:[%s2 + $0x18] sm:$0xff]
    %v33 = vld [vmem:[%s1] sm:$0xff]
    %v34 = vld [vmem:[%s1 + $0x8] sm:$0xff]
    %v35 = vld [vmem:[%s2 + $0x20] sm:$0xff]
    %vm36 = vcmask 64512
    %v38 = vsel %vm36, %v33, 0
    %v41 = vsel %vm36, %v34, 0
    %43 = vmatpush.msra.mxu0 0.0
    %44 = vmatpush.msra.mxu0 0.0
    %45 = vmatpush.msra.mxu0 0.0
    %46 = vmatpush.msra.mxu0 0.0
    %47 = vmatpush.msra.mxu0 0.0
    %48 = vmatpush.msra.mxu0 0.0
    %49 = vmatpush.msra.mxu0 0.0
    %50 = vmatpush.msra.mxu0 0.0
    %51 = vmatpush.msra.mxu0 0.0
    %52 = vmatpush.msra.mxu0 0.0
    %53 = vmatpush.msra.mxu0 0.0
    %54 = vmatpush.msra.mxu0 0.0
    %55 = vmatpush.msra.mxu0 0.0
    %56 = vmatpush.msra.mxu0 0.0
    %57 = vmatpush.msra.mxu0 0.0
    %58 = vmatpush.msra.mxu0 %v35
    %59 = vmatmul.f32.gmra.mxu0 %v38
    %v60 = vpop.f32.mrf.mxu0
    %v61 = vadd.f32 0.0, %v60
    %62 = vmatmul.f32.gmra.mxu0 %v41
    %v63 = vpop.f32.mrf.mxu0
    %v64 = vadd.f32 0.0, %v63
    %65 = vdwg.mxu0
    %vm66 = vcmask 261120
    %v68 = vsel %vm66, %v27, 0
    %v71 = vsel %vm66, %v28, 0
    %73 = vmatpush.msra.mxu0 0.0
    %74 = vmatpush.msra.mxu0 0.0
    %75 = vmatpush.msra.mxu0 0.0
    %76 = vmatpush.msra.mxu0 0.0
    %77 = vmatpush.msra.mxu0 0.0
    %78 = vmatpush.msra.mxu0 0.0
    %79 = vmatpush.msra.mxu0 0.0
    %80 = vmatpush.msra.mxu0 0.0
    %81 = vmatpush.msra.mxu0 0.0
    %82 = vmatpush.msra.mxu0 0.0
    %83 = vmatpush.msra.mxu0 0.0
    %84 = vmatpush.msra.mxu0 0.0
    %85 = vmatpush.msra.mxu0 %v32
    %86 = vmatpush.msra.mxu0 %v31
    %87 = vmatpush.msra.mxu0 %v30
    %88 = vmatpush.msra.mxu0 %v29
    %89 = vmatmul.f32.gmra.mxu0 %v68
    %v90 = vpop.f32.mrf.mxu0
    %v91 = vadd.f32 %v61, %v90
    %92 = vmatmul.f32.gmra.mxu0 %v71
    %v93 = vpop.f32.mrf.mxu0
    %v94 = vadd.f32 %v64, %v93
    %95 = vdwg.mxu0
    %v96 = vld [vmem:[%s3] sm:$0x1]
    %v98 = vperm.slane %v96, 0
    %v100 = vadd.f32 %v91, %v98
    %v101 = vadd.f32 %v94, %v98
    %v102 = vtanh.pop %v100
    %v103 = vtanh.pop %v101
    %v104 = vld [vmem:[%s4] sm:$0xff]
    %v105 = vld [vmem:[%s4 + $0x8] sm:$0xff]
    %v106 = vld [vmem:[%s4 + $0x10] sm:$0xff]
    %v107 = vld [vmem:[%s4 + $0x18] sm:$0xff]
    %v108 = vld [vmem:[%s4 + $0x20] sm:$0xff]
    %v109 = vld [vmem:[%s4 + $0x28] sm:$0xff]
    %v110 = vld [vmem:[%s4 + $0x30] sm:$0xff]
    %v111 = vld [vmem:[%s4 + $0x38] sm:$0xff]
    %v112 = vld [vmem:[%s4 + $0x40] sm:$0xff]
    %v113 = vld [vmem:[%s4 + $0x48] sm:$0xff]
    %v114 = vld [vmem:[%s4 + $0x50] sm:$0xff]
    %v115 = vld [vmem:[%s4 + $0x58] sm:$0xff]
    %v116 = vld [vmem:[%s4 + $0x60] sm:$0xff]
    %v117 = vld [vmem:[%s4 + $0x68] sm:$0xff]
    %v118 = vld [vmem:[%s4 + $0x70] sm:$0xff]
    %v119 = vld [vmem:[%s4 + $0x78] sm:$0xff]
    %v120 = vld [vmem:[%s5] sm:$0x1]
    %v122 = vperm.slane %v120, 0
    %124 = vmatpush.msra.mxu0 %v119
    %125 = vmatpush.msra.mxu0 %v118
    %126 = vmatpush.msra.mxu0 %v117
    %127 = vmatpush.msra.mxu0 %v116
    %128 = vmatpush.msra.mxu0 %v115
    %129 = vmatpush.msra.mxu0 %v114
    %130 = vmatpush.msra.mxu0 %v113
    %131 = vmatpush.msra.mxu0 %v112
    %132 = vmatpush.msra.mxu0 %v111
    %133 = vmatpush.msra.mxu0 %v110
    %134 = vmatpush.msra.mxu0 %v109
    %135 = vmatpush.msra.mxu0 %v108
    %136 = vmatpush.msra.mxu0 %v107
    %137 = vmatpush.msra.mxu0 %v106
    %138 = vmatpush.msra.mxu0 %v105
    %139 = vmatpush.msra.mxu0 %v104
    %140 = vmatmul.f32.gmra.mxu0 %v102
    %v141 = vpop.f32.mrf.mxu0
    %v142 = vadd.f32 %v122, %v141
    %143 = vmatmul.f32.gmra.mxu0 %v103
    %v144 = vpop.f32.mrf.mxu0
    %v145 = vadd.f32 %v122, %v144
    %146 = vdwg.mxu0
    %v147 = vld [vmem:[%s6] sm:$0xff]
    %v148 = vld [vmem:[%s6 + $0x8] sm:$0xff]
    %v149 = vld [vmem:[%s6 + $0x10] sm:$0xff]
    %v150 = vld [vmem:[%s6 + $0x18] sm:$0xff]
    %151 = vmatpush.msra.mxu0 0.0
    %152 = vmatpush.msra.mxu0 0.0
    %153 = vmatpush.msra.mxu0 0.0
    %154 = vmatpush.msra.mxu0 0.0
    %155 = vmatpush.msra.mxu0 0.0
    %156 = vmatpush.msra.mxu0 0.0
    %157 = vmatpush.msra.mxu0 0.0
    %158 = vmatpush.msra.mxu0 0.0
    %159 = vmatpush.msra.mxu0 0.0
    %160 = vmatpush.msra.mxu0 0.0
    %161 = vmatpush.msra.mxu0 0.0
    %162 = vmatpush.msra.mxu0 0.0
    %163 = vmatpush.msra.mxu0 %v150
    %164 = vmatpush.msra.mxu0 %v149
    %165 = vmatpush.msra.mxu0 %v148
    %166 = vmatpush.msra.mxu0 %v147
    %167 = vmatmul.f32.gmra.mxu0 %v68
    %v168 = vpop.f32.mrf.mxu0
    %v169 = vadd.f32 0.0, %v168
    %170 = vmatmul.f32.gmra.mxu0 %v71
    %v171 = vpop.f32.mrf.mxu0
    %v172 = vadd.f32 0.0, %v171
    %173 = vdwg.mxu0
    %v174 = vadd.f32 %v142, %v169
    %v175 = vadd.f32 %v145, %v172
    %176 = vst.msk [vmem:[#allocation2] sm:$0xff] %vm66, %v174
    %177 = vst.msk [vmem:[#allocation2 + $0x8] sm:$0xff] %vm66, %v175
    // Predicated region
    $region30: #{_ode_rhs.1} parent=1 // pred_check
      _
    $region31: #{_ode_rhs.1} parent=1 // pred_check_branch
      %179 = sbr.rel (0) target = $region33
    $region32: #{_ode_rhs.1} parent=1 // pred_region
      %181 = vsyncadd [#allocation3], 0
      %s182 = sshll.u32 [#allocation2], 4
      %s183 = int_to_ptr.vmem [resolvable:$true] %s182
      %s184 = sshll.u32 %s7, 4
      %s185 = int_to_ptr.hbm [resolvable:$true] %s184
      %190 = dma.vmem_to_hbm [thread:$0]  %s183, 256, %s185, [#allocation3], 128, 128, 8
    $region33: #{_ode_rhs.1} parent=1 // pred_fallthru
      _
    // Predicated region
    $region34: #{_ode_rhs.1} parent=1 // pred_check
      _
    $region35: #{_ode_rhs.1} parent=1 // pred_check_branch
      %192 = sbr.rel (0) target = $region37
    $region36: #{_ode_rhs.1} parent=1 // pred_region
      %194 = dma.done [#allocation3], 256
    $region37: #{_ode_rhs.1} parent=1 // pred_fallthru
      _
    %195 = vsyncpa [#allocation3], 1

</llo_original>
